<compile_context>
chip_gen: v5e
topology: v5e:2x2
jax: 0.10.0
libtpu: 0.0.40
codegen_flags: <defaults>
</compile_context>

<pallas_src>
import math
from functools import partial

import numpy as np
import jax
import jax.numpy as jnp
from jax.experimental import pallas as pl
from jax.experimental.pallas import tpu as pltpu


_MAX_TM = 256     # batch tile cap (sublane dim of x / out)
_MAX_TN = 512     # out-feature tile cap (lane dim of out / weight)
_MAX_TK = 2048    # reduction tile cap (lane dim of x, sublane dim of weight)


def _round_up(x: int, m: int) -> int:
    return ((x + m - 1) // m) * m


def _pick_tile(d_pad: int, unit: int, cap: int) -> int:
    """Largest multiple of `unit` that is <= cap and divides d_pad."""
    best = unit
    t = unit
    while t <= min(cap, d_pad):
        if d_pad % t == 0:
            best = t
        t += unit
    return best


def _plan_dim(d: int, unit: int, cap: int):
    """(tile, padded_dim).  Full-extent block if the dim fits in one tile
    (no padding at all); otherwise pad only to the hardware `unit` and tile
    with a divisor of the padded dim (no tile-multiple over-padding)."""
    if d <= cap:
        return d, d
    d_pad = _round_up(d, unit)
    return _pick_tile(d_pad, unit, cap), d_pad


def _filter_linear_kernel(x_ref, w_ref, b_ref, o_ref):
    # grid = (B/tm, N/tn, K/tk); K (reduction) is the last, "arbitrary" axis.
    # The f32 output block is resident across k and doubles as the accumulator.
    k = pl.program_id(2)

    @pl.when(k == 0)
    def _():
        o_ref[...] = jnp.zeros_like(o_ref)

    # bf16 MXU operands (x cast in-kernel to the prepared weight dtype),
    # f32 accumulation.  Weight is stored (K, N): native (M,K)x(K,N)
    # contraction, no transpose / XLU relayout of the weight tile.
    x = x_ref[...].astype(w_ref.dtype)
    o_ref[...] += jnp.dot(x, w_ref[...], preferred_element_type=jnp.float32)

    @pl.when(k == pl.num_programs(2) - 1)
    def _():
        o_ref[...] += b_ref[...]


def prepare_params(weight, mask, bias, *, compute_dtype=jnp.bfloat16):
    """One-time parameter preparation (NOT per forward step).

    Folds the 0/1 filter mask into the weight, transposes to the MXU-native
    (in_features, out_features) layout, casts to the MXU operand dtype and
    pads to the lane minimums the kernel's tiling plan requires.
    """
    out_f, in_f = weight.shape
    _, k_pad = _plan_dim(in_f, 128, _MAX_TK)
    _, n_pad = _plan_dim(out_f, 128, _MAX_TN)

    w_t = (mask * weight).T.astype(compute_dtype)                 # (in_f, out_f)
    if (k_pad, n_pad) != (in_f, out_f):
        w_t = jnp.zeros((k_pad, n_pad), compute_dtype).at[:in_f, :out_f].set(w_t)

    b2 = bias.astype(jnp.float32).reshape(1, out_f)
    if n_pad != out_f:
        b2 = jnp.zeros((1, n_pad), jnp.float32).at[:, :out_f].set(b2)
    return w_t, b2


@partial(jax.jit, static_argnames=("out_features",))
def filter_linear(x, w_t, bias2d, *, out_features=None):
    """FilterLinear forward.

    x:      (B, in_features)              activations (f32 or bf16)
    w_t:    (K_pad, N_pad)                from prepare_params (masked, transposed)
    bias2d: (1, N_pad) f32                from prepare_params
    returns (B, out_features) f32
    """
    B, K = x.shape
    K_pad, N_pad = w_t.shape
    if out_features is None:
        out_features = N_pad

    # Tile plan (weight/bias were already padded consistently in prepare_params).
    tm, B_pad = _plan_dim(B, 8, _MAX_TM)
    tk = K_pad if K_pad <= _MAX_TK else _pick_tile(K_pad, 128, _MAX_TK)
    tn = N_pad if N_pad <= _MAX_TN else _pick_tile(N_pad, 128, _MAX_TN)

    # v7x megacore: expose >= 2 tiles on the parallel grid axes when legal,
    # otherwise the second TensorCore idles (harmless on v5e/v6e).
    if (B_pad // tm) * (N_pad // tn) == 1:
        if tn % 256 == 0:
            tn //= 2
        elif tm % 16 == 0:
            tm //= 2

    if (B_pad, K_pad) != (B, K):
        x = jnp.zeros((B_pad, K_pad), x.dtype).at[:B, :K].set(x)

    grid = (B_pad // tm, N_pad // tn, K_pad // tk)

    bytes_accessed = (
        B_pad * K_pad * x.dtype.itemsize
        + K_pad * N_pad * w_t.dtype.itemsize
        + N_pad * 4
        + B_pad * N_pad * 4
    )
    cost = pl.CostEstimate(
        flops=2 * B_pad * K_pad * N_pad,
        transcendentals=0,
        bytes_accessed=bytes_accessed,
    )

    out_p = pl.pallas_call(
        _filter_linear_kernel,
        out_shape=jax.ShapeDtypeStruct((B_pad, N_pad), jnp.float32),
        grid_spec=pltpu.PrefetchScalarGridSpec(
            num_scalar_prefetch=0,
            grid=grid,
            in_specs=[
                pl.BlockSpec((tm, tk), lambda i, j, k: (i, k)),   # x           (B, K)
                pl.BlockSpec((tk, tn), lambda i, j, k: (k, j)),   # masked W^T  (K, N)
                pl.BlockSpec((1, tn), lambda i, j, k: (0, j)),    # bias        (1, N)
            ],
            out_specs=pl.BlockSpec((tm, tn), lambda i, j, k: (i, j)),
        ),
        compiler_params=pltpu.CompilerParams(
            dimension_semantics=("parallel", "parallel", "arbitrary"),
        ),
        cost_estimate=cost,
    )(x, w_t, bias2d)

    return out_p[:B, :out_features]


def make_params(key, num_nodes, input_dim, output_dim):
    """Deterministically build FilterLinear parameters (mirrors __init__/reset_parameters)."""
    in_features = num_nodes * input_dim
    out_features = num_nodes * output_dim

    k_filt, k_w, k_b = jax.random.split(key, 3)

    # filter_square_matrix: (num_nodes, num_nodes) of 0/1 — random binary with
    # ones on the diagonal (typical adjacency-power mask in DKFN).
    filt = (jax.random.uniform(k_filt, (num_nodes, num_nodes)) < 0.3).astype(jnp.float32)
    filt = jnp.maximum(filt, jnp.eye(num_nodes, dtype=jnp.float32))
    # torch: filter_square_matrix.repeat(output_dim, input_dim) -> tile
    mask = jnp.tile(filt, (output_dim, input_dim))              # (out_features, in_features)

    stdv = 1.0 / math.sqrt(in_features)
    weight = jax.random.uniform(k_w, (out_features, in_features),
                                minval=-stdv, maxval=stdv, dtype=jnp.float32)
    bias = jax.random.uniform(k_b, (out_features,),
                              minval=-stdv, maxval=stdv, dtype=jnp.float32)
    return weight, mask, bias


if __name__ == "__main__":
    key = jax.random.PRNGKey(0)

    # Small shapes consistent with the module: num_nodes=16, input_dim=2, output_dim=2
    num_nodes, input_dim, output_dim = 16, 2, 2
    in_features = num_nodes * input_dim      # 32
    out_features = num_nodes * output_dim    # 32
    batch = 8

    k_x, k_p = jax.random.split(key)
    x = jax.random.normal(k_x, (batch, in_features), dtype=jnp.float32)
    weight, mask, bias = make_params(k_p, num_nodes, input_dim, output_dim)

    # One-time parameter prep: fold mask, transpose to (K, N), cast to bf16, pad.
    w_t, bias2d = prepare_params(weight, mask, bias, compute_dtype=jnp.bfloat16)

    out = filter_linear(x, w_t, bias2d, out_features=out_features)
    out = jax.block_until_ready(out)

    # Reference with the same bf16 operand rounding (f32 accumulation), on host.
    x_np = np.asarray(x.astype(jnp.bfloat16).astype(jnp.float32))
    mw_np = np.asarray((mask * weight).astype(jnp.bfloat16).astype(jnp.float32))
    ref = x_np @ mw_np.T + np.asarray(bias)

    assert out.shape == (batch, out_features)
    assert np.allclose(np.asarray(out), ref, atol=1e-4, rtol=1e-4), \
        float(np.max(np.abs(np.asarray(out) - ref)))

    print("KERNEL_OK")
</pallas_src>

<mosaic_0001>
module attributes {stable_mosaic.version = 11 : i64} {
  func.func @_filter_linear_kernel(%arg0: i32, %arg1: i32, %arg2: i32, %arg3: memref<8x32xf32, #tpu.memory_space<vmem>>, %arg4: memref<32x32xbf16, #tpu.memory_space<vmem>>, %arg5: memref<1x32xf32, #tpu.memory_space<vmem>>, %arg6: memref<8x32xf32, #tpu.memory_space<vmem>>) attributes {dimension_semantics = [#tpu.dimension_semantics<parallel>, #tpu.dimension_semantics<parallel>, #tpu.dimension_semantics<arbitrary>], iteration_bounds = array<i64: 1, 1, 1>, scalar_prefetch = 0 : i64, scratch_operands = 0 : i64, tpu.core_type = #tpu.core_type<tc>, window_params = [{transform_indices = @transform_0, window_bounds = array<i64: 8, 32>}, {transform_indices = @transform_1, window_bounds = array<i64: 32, 32>}, {transform_indices = @transform_2, window_bounds = array<i64: 1, 32>}, {transform_indices = @transform_3, window_bounds = array<i64: 8, 32>}]} {
    %c0_i32 = arith.constant 0 : i32
    %0 = arith.cmpi eq, %arg2, %c0_i32 : i32
    %1 = arith.extui %0 : i1 to i32
    %c0_i32_0 = arith.constant 0 : i32
    %2 = arith.cmpi ne, %1, %c0_i32_0 : i32
    scf.if %2 {
      %cst_10 = arith.constant 0.000000e+00 : f32
      %13 = vector.broadcast %cst_10 : f32 to vector<8x32xf32>
      %c0_11 = arith.constant 0 : index
      %c0_12 = arith.constant 0 : index
      %14 = vector.load %arg6[%c0_11, %c0_12] : memref<8x32xf32, #tpu.memory_space<vmem>>, vector<8x32xf32>
      tpu.vector_store %arg6[%c0_11, %c0_12], %13 {strides = array<i32>} : memref<8x32xf32, #tpu.memory_space<vmem>>, vector<8x32xf32>,
    } else {
    }
    %c0 = arith.constant 0 : index
    %c0_1 = arith.constant 0 : index
    %3 = vector.load %arg3[%c0, %c0_1] : memref<8x32xf32, #tpu.memory_space<vmem>>, vector<8x32xf32>
    %4 = arith.truncf %3 : vector<8x32xf32> to vector<8x32xbf16>
    %c0_2 = arith.constant 0 : index
    %c0_3 = arith.constant 0 : index
    %5 = vector.load %arg6[%c0_2, %c0_3] : memref<8x32xf32, #tpu.memory_space<vmem>>, vector<8x32xf32>
    %c0_4 = arith.constant 0 : index
    %c0_5 = arith.constant 0 : index
    %6 = vector.load %arg4[%c0_4, %c0_5] : memref<32x32xbf16, #tpu.memory_space<vmem>>, vector<32x32xbf16>
    %cst = arith.constant dense<0.000000e+00> : vector<8x32xf32>
    %7 = tpu.matmul %4, %6, %cst {dimension_numbers = #tpu.dot_dimension_numbers<[1], [0], [0], [1], [0, 0, 1, 1], [], []>} : vector<8x32xbf16>, vector<32x32xbf16>, vector<8x32xf32> -> vector<8x32xf32>
    %8 = arith.addf %5, %7 : vector<8x32xf32>
    %c0_6 = arith.constant 0 : index
    %c0_7 = arith.constant 0 : index
    %9 = vector.load %arg6[%c0_6, %c0_7] : memref<8x32xf32, #tpu.memory_space<vmem>>, vector<8x32xf32>
    tpu.vector_store %arg6[%c0_6, %c0_7], %8 {strides = array<i32>} : memref<8x32xf32, #tpu.memory_space<vmem>>, vector<8x32xf32>,
    %c0_i32_8 = arith.constant 0 : i32
    %10 = arith.cmpi eq, %arg2, %c0_i32_8 : i32
    %11 = arith.extui %10 : i1 to i32
    %c0_i32_9 = arith.constant 0 : i32
    %12 = arith.cmpi ne, %11, %c0_i32_9 : i32
    scf.if %12 {
      %c0_10 = arith.constant 0 : index
      %c0_11 = arith.constant 0 : index
      %13 = vector.load %arg6[%c0_10, %c0_11] : memref<8x32xf32, #tpu.memory_space<vmem>>, vector<8x32xf32>
      %c0_12 = arith.constant 0 : index
      %c0_13 = arith.constant 0 : index
      %14 = vector.load %arg5[%c0_12, %c0_13] : memref<1x32xf32, #tpu.memory_space<vmem>>, vector<1x32xf32>
      %15 = vector.broadcast %14 : vector<1x32xf32> to vector<8x32xf32>
      %16 = arith.addf %13, %15 : vector<8x32xf32>
      %c0_14 = arith.constant 0 : index
      %c0_15 = arith.constant 0 : index
      %17 = vector.load %arg6[%c0_14, %c0_15] : memref<8x32xf32, #tpu.memory_space<vmem>>, vector<8x32xf32>
      tpu.vector_store %arg6[%c0_14, %c0_15], %16 {strides = array<i32>} : memref<8x32xf32, #tpu.memory_space<vmem>>, vector<8x32xf32>,
    } else {
    }
    return
  }
  func.func @transform_0(%arg0: i32, %arg1: i32, %arg2: i32) -> (i32, i32) {
    %c0_i32 = arith.constant 0 : i32
    return %arg0, %arg2 : i32, i32
  }
  func.func @transform_1(%arg0: i32, %arg1: i32, %arg2: i32) -> (i32, i32) {
    %c0_i32 = arith.constant 0 : i32
    return %arg2, %arg1 : i32, i32
  }
  func.func @transform_2(%arg0: i32, %arg1: i32, %arg2: i32) -> (i32, i32) {
    %c0_i32 = arith.constant 0 : i32
    %c0_i32_0 = arith.constant 0 : i32
    return %c0_i32, %arg1 : i32, i32
  }
  func.func @transform_3(%arg0: i32, %arg1: i32, %arg2: i32) -> (i32, i32) {
    %c0_i32 = arith.constant 0 : i32
    return %arg0, %arg1 : i32, i32
  }
}

</mosaic_0001>

<llo_original>
// kernel: filter_linear.1
$region0: #{filter_linear.1}
  #allocation0 [shape = 'u32[]', space=smem, size = 0x4, offset = 0x4, fixed_abs, tag = 'smem constant byte address 0x4 - core index']
  #allocation1 [shape = 'u32[72,128]{1,0:T(1,128)}', space=vmem, size = 0x9000, scoped, tag = 'internal scratch']
  %s0 = inlined_call_operand.hbm [shape: f32[8,32], index: 0, kind: input, shape index: {}]
  %s1 = inlined_call_operand.hbm [shape: bf16[32,32], index: 1, kind: input, shape index: {}]
  %s2 = inlined_call_operand.vmem [shape: f32[1,32], index: 2, kind: input, shape index: {}]
  %s3 = inlined_call_operand.hbm [shape: f32[8,32], index: 3, kind: output, shape index: {}]
  %s4 = sld [smem:[#allocation0]]
  $region38: #{filter_linear.1} parent=0
    _
  %s6 = ssub.s32 1, %s4
  %s7 = scalar_select 0, %s6, %s4
  $region1: #{filter_linear.1} parent=0
    #allocation2 [shape = 'u8[4096]{0}', space=vmem, size = 0x1000, scoped, tag = 'input window, operand 0, single buffered']
    #allocation3 [shape = 's32[1]{0}', space=sflag, size = 0x4, scoped, tag = 'scoped memory for filter_linear.1']
    #allocation4 [shape = 's32[1]{0}', space=sflag, size = 0x4, scoped, tag = 'scoped memory for filter_linear.1']
    #allocation5 [shape = 'u8[8192]{0}', space=vmem, size = 0x2000, scoped, tag = 'input window, operand 1, single buffered']
    #allocation6 [shape = 's32[1]{0}', space=sflag, size = 0x4, scoped, tag = 'scoped memory for filter_linear.1']
    #allocation7 [shape = 'u8[4096]{0}', space=vmem, size = 0x1000, scoped, tag = 'output window, operand 0, single buffered']
    %8 = vsyncpa [#allocation3], 0
    %9 = vsyncpa [#allocation6], 0
    %10 = vsyncpa [#allocation4], 0
    // Predicated region
    $region2: #{filter_linear.1} parent=1 // pred_check
      _
    $region3: #{filter_linear.1} parent=1 // pred_check_branch
      %12 = sbr.rel (0) target = $region5
    $region4: #{filter_linear.1} parent=1 // pred_region
      %14 = vsyncadd [#allocation3], 0
      %s16 = sshll.u32 %s0, 4
      %s17 = int_to_ptr.hbm [resolvable:$true] %s16
      %s18 = sshll.u32 [#allocation2], 4
      %s19 = int_to_ptr.vmem [resolvable:$true] %s18
      %21 = dma.hbm_to_vmem [thread:$0]  %s17, 128, %s19, [#allocation3]
    $region5: #{filter_linear.1} parent=1 // pred_fallthru
      _
    // Predicated region
    $region6: #{filter_linear.1} parent=1 // pred_check
      _
    $region7: #{filter_linear.1} parent=1 // pred_check_branch
      %23 = sbr.rel (0) target = $region9
    $region8: #{filter_linear.1} parent=1 // pred_region
      %25 = vsyncadd [#allocation6], 0
      %s26 = sshll.u32 %s1, 4
      %s27 = int_to_ptr.hbm [resolvable:$true] %s26
      %s28 = sshll.u32 [#allocation5], 4
      %s29 = int_to_ptr.vmem [resolvable:$true] %s28
      %34 = dma.hbm_to_vmem [thread:$0]  %s27, 256, %s29, [#allocation6], 64, 64, 4
    $region9: #{filter_linear.1} parent=1 // pred_fallthru
      _
    // Predicated region
    $region10: #{filter_linear.1} parent=1 // pred_check
      _
    $region11: #{filter_linear.1} parent=1 // pred_check_branch
      %36 = sbr.rel (0) target = $region13
    $region12: #{filter_linear.1} parent=1 // pred_region
      _
    $region13: #{filter_linear.1} parent=1 // pred_fallthru
      _
    // Predicated region
    $region14: #{filter_linear.1} parent=1 // pred_check
      _
    $region15: #{filter_linear.1} parent=1 // pred_check_branch
      %38 = sbr.rel (0) target = $region17
    $region16: #{filter_linear.1} parent=1 // pred_region
      %40 = dma.done [#allocation3], 128
    $region17: #{filter_linear.1} parent=1 // pred_fallthru
      _
    // Predicated region
    $region18: #{filter_linear.1} parent=1 // pred_check
      _
    $region19: #{filter_linear.1} parent=1 // pred_check_branch
      %42 = sbr.rel (0) target = $region21
    $region20: #{filter_linear.1} parent=1 // pred_region
      %44 = dma.done [#allocation6], 256
    $region21: #{filter_linear.1} parent=1 // pred_fallthru
      _
    %p46 = scmp.eq.s32.totalorder 0, 0
    // Predicated region
    $region22: #{filter_linear.1} parent=1 // pred_check
      %p47 = pneg %p46
    $region23: #{filter_linear.1} parent=1 // pred_check_branch
      %49 = sbr.rel (%p47) target = $region25
    $region24: #{filter_linear.1} parent=1 // pred_region
      %vm50 = vcmask 261120
      %51 = vst.msk [vmem:[#allocation7] sm:$0xff] %vm50, 0.0
    $region25: #{filter_linear.1} parent=1 // pred_fallthru
      _
    %v52 = vld [vmem:[#allocation2] sm:$0xff]
    %v53 = vpack.c.bf16 %v52, %v52
    %v54 = vld [vmem:[#allocation7] sm:$0xff]
    %v55 = vld [vmem:[#allocation5] sm:$0xf]
    %v56 = vld [vmem:[#allocation5 + $0x4] sm:$0xf]
    %v57 = vld [vmem:[#allocation5 + $0x8] sm:$0xf]
    %v58 = vld [vmem:[#allocation5 + $0xc] sm:$0xf]
    %v63 = vunpack.c.l.b16 %v55
    %v64 = vunpack.c.l.b16 %v56
    %v65 = vunpack.c.l.b16 %v57
    %v66 = vunpack.c.l.b16 %v58
    %v67 = vpack.c.b16 %v64, %v63
    %v68 = vpack.c.b16 %v66, %v65
    %vm71 = vcmask 261120
    %v73 = vsel %vm71, %v53, 0
    %75 = vmatpush.bf16.msra.mxu0 0
    %76 = vmatpush.bf16.msra.mxu0 0
    %77 = vmatpush.bf16.msra.mxu0 0
    %78 = vmatpush.bf16.msra.mxu0 0
    %79 = vmatpush.bf16.msra.mxu0 0
    %80 = vmatpush.bf16.msra.mxu0 0
    %81 = vmatpush.bf16.msra.mxu0 %v68
    %82 = vmatpush.bf16.msra.mxu0 %v67
    %83 = vmatmul.bf16.gmra.mxu0 %v73
    %v84 = vpop.f32.mrf.mxu0
    %v85 = vadd.f32 0.0, %v84
    %v86 = vpop.f32.mrf.mxu0
    %87 = vdwg.mxu0
    %v88 = vadd.f32 %v54, %v85
    %89 = vst.msk [vmem:[#allocation7] sm:$0xff] %vm71, %v88
    // Predicated region
    $region26: #{filter_linear.1} parent=1 // pred_check
      %p90 = pneg %p46
    $region27: #{filter_linear.1} parent=1 // pred_check_branch
      %92 = sbr.rel (%p90) target = $region29
    $region28: #{filter_linear.1} parent=1 // pred_region
      %v93 = vld [vmem:[#allocation7] sm:$0xff]
      %v94 = vld [vmem:[%s2] sm:$0x1]
      %v96 = vperm.slane %v94, 0
      %v98 = vadd.f32 %v93, %v96
      %99 = vst.msk [vmem:[#allocation7] sm:$0xff] %vm71, %v98
    $region29: #{filter_linear.1} parent=1 // pred_fallthru
      _
    // Predicated region
    $region30: #{filter_linear.1} parent=1 // pred_check
      _
    $region31: #{filter_linear.1} parent=1 // pred_check_branch
      %101 = sbr.rel (0) target = $region33
    $region32: #{filter_linear.1} parent=1 // pred_region
      %103 = vsyncadd [#allocation4], 0
      %s105 = sshll.u32 [#allocation7], 4
      %s106 = int_to_ptr.vmem [resolvable:$true] %s105
      %s107 = sshll.u32 %s3, 4
      %s108 = int_to_ptr.hbm [resolvable:$true] %s107
      %110 = dma.vmem_to_hbm [thread:$0]  %s106, 128, %s108, [#allocation4]
    $region33: #{filter_linear.1} parent=1 // pred_fallthru
      _
    // Predicated region
    $region34: #{filter_linear.1} parent=1 // pred_check
      _
    $region35: #{filter_linear.1} parent=1 // pred_check_branch
      %112 = sbr.rel (0) target = $region37
    $region36: #{filter_linear.1} parent=1 // pred_region
      %114 = dma.done [#allocation4], 128
    $region37: #{filter_linear.1} parent=1 // pred_fallthru
      _
    %115 = vsyncpa [#allocation3], 1
    %116 = vsyncpa [#allocation6], 1
    %117 = vsyncpa [#allocation4], 1

</llo_original>
